<compile_context>
chip_gen: v7x
topology: tpu7x:2x2x1
jax: 0.10.0
libtpu: 0.0.40
codegen_flags: <defaults>
</compile_context>

<pallas_src>
import jax
import jax.numpy as jnp
from jax.experimental import pallas as pl
from jax.experimental.pallas import tpu as pltpu

_LANE = 128      # last-dim tiling granularity (f32)
_SUBLANE = 8     # second-to-last-dim tiling granularity (f32)
_MAX_TB = 512    # max rows per batch tile


def _round_up(x, m):
    return ((x + m - 1) // m) * m


def mlp_kernel(x_ref, w1_ref, b1_ref, w2_ref, b2_ref, o_ref, h_ref):
    # First linear: (TB, in_p) @ (in_p, hid_p), f32 accumulation, f32 bias add.
    h_ref[...] = (
        jnp.dot(x_ref[...], w1_ref[...], preferred_element_type=jnp.float32)
        + b1_ref[...]
    )
    # Second linear: cast h to the weight dtype so bf16 weights take the fast
    # MXU path; accumulation stays f32.
    y = (
        jnp.dot(h_ref[...].astype(w2_ref.dtype), w2_ref[...],
                preferred_element_type=jnp.float32)
        + b2_ref[...]
    )
    o_ref[...] = jnp.tanh(y).astype(o_ref.dtype)


def simple_network_forward(x, w1, b1, w2, b2, *, compute_dtype=None,
                           block_b=_MAX_TB):
    """x: (B, in_dim); w1: (in_dim, hidden); b1: (hidden,);
    w2: (hidden, out_dim); b2: (out_dim,). Returns (B, out_dim) in x.dtype.

    compute_dtype: optional lower-precision dtype (e.g. jnp.bfloat16) for
    x / w1 / w2. Biases and accumulation stay f32.
    """
    B, in_dim = x.shape
    hidden = w1.shape[1]
    out_dim = w2.shape[1]
    out_dtype = x.dtype

    # --- pad feature dims to lane multiples (128) for unmasked stores / full
    #     MXU tiles; zero padding keeps the math exact. -----------------------
    in_p = _round_up(in_dim, _LANE)
    hid_p = _round_up(hidden, _LANE)
    out_p = _round_up(out_dim, _LANE)

    # --- batch tile: multiple of 8, capped; pad batch to a whole # of tiles. -
    tb = _round_up(min(max(block_b, _SUBLANE), _round_up(B, _SUBLANE)), _SUBLANE)
    B_p = _round_up(B, tb)
    grid_b = B_p // tb

    xp = jnp.pad(x, ((0, B_p - B), (0, in_p - in_dim)))
    w1p = jnp.pad(w1, ((0, in_p - in_dim), (0, hid_p - hidden)))
    w2p = jnp.pad(w2, ((0, hid_p - hidden), (0, out_p - out_dim)))
    b1p = jnp.pad(b1, (0, hid_p - hidden)).reshape(1, hid_p).astype(jnp.float32)
    b2p = jnp.pad(b2, (0, out_p - out_dim)).reshape(1, out_p).astype(jnp.float32)

    if compute_dtype is not None:
        xp = xp.astype(compute_dtype)
        w1p = w1p.astype(compute_dtype)
        w2p = w2p.astype(compute_dtype)

    # --- VMEM budget: double-buffered activation tiles + resident weights +
    #     biases + h scratch; capped at 64 MiB so the same tiling works on
    #     v7x's smaller physical VMEM. ----------------------------------------
    act_b = xp.dtype.itemsize
    w_b = w1p.dtype.itemsize
    est = (
        2 * tb * in_p * act_b                 # x tiles (double-buffered)
        + 2 * tb * out_p * jnp.dtype(out_dtype).itemsize  # out tiles
        + 2 * (in_p * hid_p + hid_p * out_p) * w_b        # weights
        + 2 * (hid_p + out_p) * 4                         # biases
        + tb * hid_p * 4                                  # h scratch (f32)
    )
    vmem_limit = int(min(64 * 1024 * 1024, max(2 * est, 16 * 1024 * 1024)))

    out_padded = pl.pallas_call(
        mlp_kernel,
        out_shape=jax.ShapeDtypeStruct((B_p, out_p), out_dtype),
        grid=(grid_b,),
        in_specs=[
            pl.BlockSpec((tb, in_p), lambda i: (i, 0)),      # x tile per step
            pl.BlockSpec((in_p, hid_p), lambda i: (0, 0)),   # W1 resident
            pl.BlockSpec((1, hid_p), lambda i: (0, 0)),      # b1 resident
            pl.BlockSpec((hid_p, out_p), lambda i: (0, 0)),  # W2 resident
            pl.BlockSpec((1, out_p), lambda i: (0, 0)),      # b2 resident
        ],
        out_specs=pl.BlockSpec((tb, out_p), lambda i: (i, 0)),
        scratch_shapes=[pltpu.VMEM((tb, hid_p), jnp.float32)],
        compiler_params=pltpu.CompilerParams(
            dimension_semantics=("parallel",),
            vmem_limit_bytes=vmem_limit,
        ),
    )(xp, w1p, b1p, w2p, b2p)

    return out_padded[:B, :out_dim]


def init_params(key, in_dim, hidden_units, out_dim):
    """Deterministic init mirroring nn.Linear's U(-1/sqrt(fan_in), 1/sqrt(fan_in))."""
    k1, k2, k3, k4 = jax.random.split(key, 4)
    bound1 = 1.0 / jnp.sqrt(in_dim)
    bound2 = 1.0 / jnp.sqrt(hidden_units)
    # Stored as (in_features, out_features) = PyTorch weight transposed.
    w1 = jax.random.uniform(k1, (in_dim, hidden_units), jnp.float32, -bound1, bound1)
    b1 = jax.random.uniform(k2, (hidden_units,), jnp.float32, -bound1, bound1)
    w2 = jax.random.uniform(k3, (hidden_units, out_dim), jnp.float32, -bound2, bound2)
    b2 = jax.random.uniform(k4, (out_dim,), jnp.float32, -bound2, bound2)
    return w1, b1, w2, b2


if __name__ == "__main__":
    key = jax.random.PRNGKey(0)
    kx, kp = jax.random.split(key)

    # Small shapes consistent with the module: batch=8, in_dim=16, hidden=32, out_dim=8
    batch, in_dim, hidden_units, out_dim = 8, 16, 32, 8
    x = jax.random.normal(kx, (batch, in_dim), dtype=jnp.float32)
    w1, b1, w2, b2 = init_params(kp, in_dim, hidden_units, out_dim)

    out = simple_network_forward(x, w1, b1, w2, b2)
    out = jax.block_until_ready(out)

    ref = jnp.tanh((x @ w1 + b1) @ w2 + b2)
    assert out.shape == (batch, out_dim)
    assert jnp.allclose(out, ref, atol=1e-5, rtol=1e-5)

    # Second check: multi-tile batch grid + padding + bf16 MXU path.
    batch2, in2, hid2, out2 = 1000, 64, 256, 48
    kx2, kp2 = jax.random.split(jax.random.PRNGKey(1))
    x2 = jax.random.normal(kx2, (batch2, in2), dtype=jnp.float32)
    p2 = init_params(kp2, in2, hid2, out2)

    out_bf16 = simple_network_forward(x2, *p2, compute_dtype=jnp.bfloat16)
    out_bf16 = jax.block_until_ready(out_bf16)
    ref2 = jnp.tanh((x2 @ p2[0] + p2[1]) @ p2[2] + p2[3])
    assert out_bf16.shape == (batch2, out2)
    assert jnp.allclose(out_bf16, ref2, atol=2e-2, rtol=2e-2)

    print("KERNEL_OK")
</pallas_src>

<mosaic_0001>
module attributes {stable_mosaic.version = 11 : i64} {
  func.func @mlp_kernel(%arg0: i32, %arg1: memref<8x128xf32, #tpu.memory_space<vmem>>, %arg2: memref<128x128xf32, #tpu.memory_space<vmem>>, %arg3: memref<1x128xf32, #tpu.memory_space<vmem>>, %arg4: memref<128x128xf32, #tpu.memory_space<vmem>>, %arg5: memref<1x128xf32, #tpu.memory_space<vmem>>, %arg6: memref<8x128xf32, #tpu.memory_space<vmem>>, %arg7: memref<8x128xf32, #tpu.memory_space<vmem>>) attributes {dimension_semantics = [#tpu.dimension_semantics<parallel>], iteration_bounds = array<i64: 1>, scalar_prefetch = 0 : i64, scratch_operands = 1 : i64, tpu.core_type = #tpu.core_type<tc>, window_params = [{transform_indices = @transform_0, window_bounds = array<i64: 8, 128>}, {pipeline_mode = #tpu.pipeline_mode<synchronous>, transform_indices = @transform_1, window_bounds = array<i64: 128, 128>}, {pipeline_mode = #tpu.pipeline_mode<synchronous>, transform_indices = @transform_2, window_bounds = array<i64: 1, 128>}, {pipeline_mode = #tpu.pipeline_mode<synchronous>, transform_indices = @transform_3, window_bounds = array<i64: 128, 128>}, {pipeline_mode = #tpu.pipeline_mode<synchronous>, transform_indices = @transform_4, window_bounds = array<i64: 1, 128>}, {transform_indices = @transform_5, window_bounds = array<i64: 8, 128>}]} {
    %c0 = arith.constant 0 : index
    %c0_0 = arith.constant 0 : index
    %0 = vector.load %arg1[%c0, %c0_0] : memref<8x128xf32, #tpu.memory_space<vmem>>, vector<8x128xf32>
    %c0_1 = arith.constant 0 : index
    %c0_2 = arith.constant 0 : index
    %1 = vector.load %arg2[%c0_1, %c0_2] : memref<128x128xf32, #tpu.memory_space<vmem>>, vector<128x128xf32>
    %cst = arith.constant dense<0.000000e+00> : vector<8x128xf32>
    %2 = tpu.matmul %0, %1, %cst {dimension_numbers = #tpu.dot_dimension_numbers<[1], [0], [0], [1], [0, 0, 1, 1], [], []>} : vector<8x128xf32>, vector<128x128xf32>, vector<8x128xf32> -> vector<8x128xf32>
    %c0_3 = arith.constant 0 : index
    %c0_4 = arith.constant 0 : index
    %3 = vector.load %arg3[%c0_3, %c0_4] : memref<1x128xf32, #tpu.memory_space<vmem>>, vector<1x128xf32>
    %4 = vector.broadcast %3 : vector<1x128xf32> to vector<8x128xf32>
    %5 = arith.addf %2, %4 : vector<8x128xf32>
    %c0_5 = arith.constant 0 : index
    %c0_6 = arith.constant 0 : index
    %6 = vector.load %arg7[%c0_5, %c0_6] : memref<8x128xf32, #tpu.memory_space<vmem>>, vector<8x128xf32>
    tpu.vector_store %arg7[%c0_5, %c0_6], %5 {strides = array<i32>} : memref<8x128xf32, #tpu.memory_space<vmem>>, vector<8x128xf32>,
    %c0_7 = arith.constant 0 : index
    %c0_8 = arith.constant 0 : index
    %7 = vector.load %arg7[%c0_7, %c0_8] : memref<8x128xf32, #tpu.memory_space<vmem>>, vector<8x128xf32>
    %c0_9 = arith.constant 0 : index
    %c0_10 = arith.constant 0 : index
    %8 = vector.load %arg4[%c0_9, %c0_10] : memref<128x128xf32, #tpu.memory_space<vmem>>, vector<128x128xf32>
    %cst_11 = arith.constant dense<0.000000e+00> : vector<8x128xf32>
    %9 = tpu.matmul %7, %8, %cst_11 {dimension_numbers = #tpu.dot_dimension_numbers<[1], [0], [0], [1], [0, 0, 1, 1], [], []>} : vector<8x128xf32>, vector<128x128xf32>, vector<8x128xf32> -> vector<8x128xf32>
    %c0_12 = arith.constant 0 : index
    %c0_13 = arith.constant 0 : index
    %10 = vector.load %arg5[%c0_12, %c0_13] : memref<1x128xf32, #tpu.memory_space<vmem>>, vector<1x128xf32>
    %11 = vector.broadcast %10 : vector<1x128xf32> to vector<8x128xf32>
    %12 = arith.addf %9, %11 : vector<8x128xf32>
    %13 = math.tanh %12 : vector<8x128xf32>
    %c0_14 = arith.constant 0 : index
    %c0_15 = arith.constant 0 : index
    %14 = vector.load %arg6[%c0_14, %c0_15] : memref<8x128xf32, #tpu.memory_space<vmem>>, vector<8x128xf32>
    tpu.vector_store %arg6[%c0_14, %c0_15], %13 {strides = array<i32>} : memref<8x128xf32, #tpu.memory_space<vmem>>, vector<8x128xf32>,
    return
  }
  func.func @transform_0(%arg0: i32) -> (i32, i32) {
    %c0_i32 = arith.constant 0 : i32
    %c0_i32_0 = arith.constant 0 : i32
    return %arg0, %c0_i32 : i32, i32
  }
  func.func @transform_1(%arg0: i32) -> (i32, i32) {
    %c0_i32 = arith.constant 0 : i32
    %c0_i32_0 = arith.constant 0 : i32
    %c0_i32_1 = arith.constant 0 : i32
    return %c0_i32, %c0_i32_0 : i32, i32
  }
  func.func @transform_2(%arg0: i32) -> (i32, i32) {
    %c0_i32 = arith.constant 0 : i32
    %c0_i32_0 = arith.constant 0 : i32
    %c0_i32_1 = arith.constant 0 : i32
    return %c0_i32, %c0_i32_0 : i32, i32
  }
  func.func @transform_3(%arg0: i32) -> (i32, i32) {
    %c0_i32 = arith.constant 0 : i32
    %c0_i32_0 = arith.constant 0 : i32
    %c0_i32_1 = arith.constant 0 : i32
    return %c0_i32, %c0_i32_0 : i32, i32
  }
  func.func @transform_4(%arg0: i32) -> (i32, i32) {
    %c0_i32 = arith.constant 0 : i32
    %c0_i32_0 = arith.constant 0 : i32
    %c0_i32_1 = arith.constant 0 : i32
    return %c0_i32, %c0_i32_0 : i32, i32
  }
  func.func @transform_5(%arg0: i32) -> (i32, i32) {
    %c0_i32 = arith.constant 0 : i32
    %c0_i32_0 = arith.constant 0 : i32
    return %arg0, %c0_i32 : i32, i32
  }
}

</mosaic_0001>

<llo_original>
// kernel: tpu_custom_call.1
$region0: #{tpu_custom_call.1}
  #allocation0 [shape = 'u32[]', space=smem, size = 0x4, offset = 0x4, fixed_abs, tag = 'smem constant byte address 0x4 - core index']
  #allocation1 [shape = 'u32[144,128]{1,0:T(1,128)}', space=vmem, size = 0x12000, scoped, tag = 'internal scratch']
  #allocation2 [shape = 'f32[8,128]{1,0:T(8,128)}', space=vmem, size = 0x1000, scoped, tag = 'scratch operand']
  %s0 = inlined_call_operand.hbm [shape: f32[8,128], index: 0, kind: input, shape index: {}]
  %s1 = inlined_call_operand.hbm [shape: f32[128,128], index: 1, kind: input, shape index: {}]
  %s2 = inlined_call_operand.vmem [shape: f32[1,128], index: 2, kind: input, shape index: {}]
  %s3 = inlined_call_operand.hbm [shape: f32[128,128], index: 3, kind: input, shape index: {}]
  %s4 = inlined_call_operand.vmem [shape: f32[1,128], index: 4, kind: input, shape index: {}]
  %s5 = inlined_call_operand.hbm [shape: f32[8,128], index: 5, kind: output, shape index: {}]
  %s6 = sld [smem:[#allocation0]]
  $region42: #{tpu_custom_call.1} parent=0
    _
  %s8 = ssub.s32 1, %s6
  %s9 = scalar_select 0, %s8, %s6
  $region1: #{tpu_custom_call.1} parent=0
    #allocation3 [shape = 'u8[4096]{0}', space=vmem, size = 0x1000, scoped, tag = 'input window, operand 0, single buffered']
    #allocation4 [shape = 's32[1]{0}', space=sflag, size = 0x4, scoped, tag = 'scoped memory for tpu_custom_call.1']
    #allocation5 [shape = 's32[1]{0}', space=sflag, size = 0x4, scoped, tag = 'scoped memory for tpu_custom_call.1']
    #allocation6 [shape = 'u8[65536]{0}', space=vmem, size = 0x10000, scoped, tag = 'input window, operand 1, single buffered']
    #allocation7 [shape = 's32[1]{0}', space=sflag, size = 0x4, scoped, tag = 'scoped memory for tpu_custom_call.1']
    #allocation8 [shape = 'u8[65536]{0}', space=vmem, size = 0x10000, scoped, tag = 'input window, operand 3, single buffered']
    #allocation9 [shape = 'u8[4096]{0}', space=vmem, size = 0x1000, scoped, tag = 'output window, operand 0, single buffered']
    %10 = vsyncpa [#allocation4], 0
    %11 = vsyncpa [#allocation7], 0
    %12 = vsyncpa [#allocation5], 0
    // Predicated region
    $region2: #{tpu_custom_call.1} parent=1 // pred_check
      _
    $region3: #{tpu_custom_call.1} parent=1 // pred_check_branch
      %14 = sbr.rel (0) target = $region5
    $region4: #{tpu_custom_call.1} parent=1 // pred_region
      %s16 = ssub.s32 128, 128
      %17 = vsyncadd [#allocation4], %s16
      %s19 = sshll.u32 [#allocation3], 4
      %s20 = int_to_ptr.vmem [resolvable:$true] %s19
      %22 = dma.hbm_to_vmem [thread:$0]  %s0, 128, %s20, [#allocation4]
    $region5: #{tpu_custom_call.1} parent=1 // pred_fallthru
      _
    // Predicated region
    $region6: #{tpu_custom_call.1} parent=1 // pred_check
      _
    $region7: #{tpu_custom_call.1} parent=1 // pred_check_branch
      %24 = sbr.rel (0) target = $region9
    $region8: #{tpu_custom_call.1} parent=1 // pred_region
      %s26 = ssub.s32 2048, 2048
      %27 = vsyncadd [#allocation7], %s26
      %s28 = sshll.u32 [#allocation6], 4
      %s29 = int_to_ptr.vmem [resolvable:$true] %s28
      %34 = dma.hbm_to_vmem [thread:$0]  %s1, 2048, %s29, [#allocation7], 128, 128, 8
    $region9: #{tpu_custom_call.1} parent=1 // pred_fallthru
      _
    // Predicated region
    $region10: #{tpu_custom_call.1} parent=1 // pred_check
      _
    $region11: #{tpu_custom_call.1} parent=1 // pred_check_branch
      %36 = sbr.rel (0) target = $region13
    $region12: #{tpu_custom_call.1} parent=1 // pred_region
      _
    $region13: #{tpu_custom_call.1} parent=1 // pred_fallthru
      _
    // Predicated region
    $region14: #{tpu_custom_call.1} parent=1 // pred_check
      _
    $region15: #{tpu_custom_call.1} parent=1 // pred_check_branch
      %38 = sbr.rel (0) target = $region17
    $region16: #{tpu_custom_call.1} parent=1 // pred_region
      %s40 = ssub.s32 2048, 2048
      %41 = vsyncadd [#allocation7], %s40
      %s42 = sshll.u32 [#allocation8], 4
      %s43 = int_to_ptr.vmem [resolvable:$true] %s42
      %48 = dma.hbm_to_vmem [thread:$0]  %s3, 2048, %s43, [#allocation7], 128, 128, 8
    $region17: #{tpu_custom_call.1} parent=1 // pred_fallthru
      _
    // Predicated region
    $region18: #{tpu_custom_call.1} parent=1 // pred_check
      _
    $region19: #{tpu_custom_call.1} parent=1 // pred_check_branch
      %50 = sbr.rel (0) target = $region21
    $region20: #{tpu_custom_call.1} parent=1 // pred_region
      _
    $region21: #{tpu_custom_call.1} parent=1 // pred_fallthru
      _
    // Predicated region
    $region22: #{tpu_custom_call.1} parent=1 // pred_check
      _
    $region23: #{tpu_custom_call.1} parent=1 // pred_check_branch
      %52 = sbr.rel (0) target = $region25
    $region24: #{tpu_custom_call.1} parent=1 // pred_region
      %53 = dma.done [#allocation4], 128
    $region25: #{tpu_custom_call.1} parent=1 // pred_fallthru
      _
    // Predicated region
    $region26: #{tpu_custom_call.1} parent=1 // pred_check
      _
    $region27: #{tpu_custom_call.1} parent=1 // pred_check_branch
      %55 = sbr.rel (0) target = $region29
    $region28: #{tpu_custom_call.1} parent=1 // pred_region
      %56 = dma.done [#allocation7], 2048
    $region29: #{tpu_custom_call.1} parent=1 // pred_fallthru
      _
    // Predicated region
    $region30: #{tpu_custom_call.1} parent=1 // pred_check
      _
    $region31: #{tpu_custom_call.1} parent=1 // pred_check_branch
      %58 = sbr.rel (0) target = $region33
    $region32: #{tpu_custom_call.1} parent=1 // pred_region
      %59 = dma.done [#allocation7], 2048
    $region33: #{tpu_custom_call.1} parent=1 // pred_fallthru
      _
    %v60 = vld [vmem:[#allocation3] sm:$0xff]
    %v61 = vld [vmem:[#allocation6] sm:$0xff]
    %v62 = vld [vmem:[#allocation6 + $0x8] sm:$0xff]
    %v63 = vld [vmem:[#allocation6 + $0x10] sm:$0xff]
    %v64 = vld [vmem:[#allocation6 + $0x18] sm:$0xff]
    %v65 = vld [vmem:[#allocation6 + $0x20] sm:$0xff]
    %v66 = vld [vmem:[#allocation6 + $0x28] sm:$0xff]
    %v67 = vld [vmem:[#allocation6 + $0x30] sm:$0xff]
    %v68 = vld [vmem:[#allocation6 + $0x38] sm:$0xff]
    %v69 = vld [vmem:[#allocation6 + $0x40] sm:$0xff]
    %v70 = vld [vmem:[#allocation6 + $0x48] sm:$0xff]
    %v71 = vld [vmem:[#allocation6 + $0x50] sm:$0xff]
    %v72 = vld [vmem:[#allocation6 + $0x58] sm:$0xff]
    %v73 = vld [vmem:[#allocation6 + $0x60] sm:$0xff]
    %v74 = vld [vmem:[#allocation6 + $0x68] sm:$0xff]
    %v75 = vld [vmem:[#allocation6 + $0x70] sm:$0xff]
    %v76 = vld [vmem:[#allocation6 + $0x78] sm:$0xff]
    %v77 = vld [vmem:[%s2] sm:$0x1]
    %v79 = vlaneseq
    %v80 = vshrl.u32 %v79, 7
    %v81 = vsub.s32 0, %v80
    %v82 = vrot.slane %v77, %v81
    %84 = vmatprep.subr.mxu0 0.0
    %85 = vmatpush1.msra.mxu0 %v61
    %86 = vmatprep.subr.mxu0 0.0
    %87 = vmatpush1.msra.mxu0 %v62
    %88 = vmatprep.subr.mxu0 0.0
    %89 = vmatpush1.msra.mxu0 %v63
    %90 = vmatprep.subr.mxu0 0.0
    %91 = vmatpush1.msra.mxu0 %v64
    %92 = vmatprep.subr.mxu0 0.0
    %93 = vmatpush1.msra.mxu0 %v65
    %94 = vmatprep.subr.mxu0 0.0
    %95 = vmatpush1.msra.mxu0 %v66
    %96 = vmatprep.subr.mxu0 0.0
    %97 = vmatpush1.msra.mxu0 %v67
    %98 = vmatprep.subr.mxu0 0.0
    %99 = vmatpush1.msra.mxu0 %v68
    %100 = vmatprep.subr.mxu0 0.0
    %101 = vmatpush1.msra.mxu0 %v69
    %102 = vmatprep.subr.mxu0 0.0
    %103 = vmatpush1.msra.mxu0 %v70
    %104 = vmatprep.subr.mxu0 0.0
    %105 = vmatpush1.msra.mxu0 %v71
    %106 = vmatprep.subr.mxu0 0.0
    %107 = vmatpush1.msra.mxu0 %v72
    %108 = vmatprep.subr.mxu0 0.0
    %109 = vmatpush1.msra.mxu0 %v73
    %110 = vmatprep.subr.mxu0 0.0
    %111 = vmatpush1.msra.mxu0 %v74
    %112 = vmatprep.subr.mxu0 0.0
    %113 = vmatpush1.msra.mxu0 %v75
    %114 = vmatprep.subr.mxu0 0.0
    %115 = vmatpush1.msra.mxu0 %v76
    %116 = vmatprep.subr.mxu0 0.0
    %117 = vmatpush1.msra.mxu0 0.0
    %118 = vmatprep.subr.mxu0 0.0
    %119 = vmatpush1.msra.mxu0 0.0
    %120 = vmatprep.subr.mxu0 0.0
    %121 = vmatpush1.msra.mxu0 0.0
    %122 = vmatprep.subr.mxu0 0.0
    %123 = vmatpush1.msra.mxu0 0.0
    %124 = vmatprep.subr.mxu0 0.0
    %125 = vmatpush1.msra.mxu0 0.0
    %126 = vmatprep.subr.mxu0 0.0
    %127 = vmatpush1.msra.mxu0 0.0
    %128 = vmatprep.subr.mxu0 0.0
    %129 = vmatpush1.msra.mxu0 0.0
    %130 = vmatprep.subr.mxu0 0.0
    %131 = vmatpush1.msra.mxu0 0.0
    %132 = vmatprep.subr.mxu0 0.0
    %133 = vmatpush1.msra.mxu0 0.0
    %134 = vmatprep.subr.mxu0 0.0
    %135 = vmatpush1.msra.mxu0 0.0
    %136 = vmatprep.subr.mxu0 0.0
    %137 = vmatpush1.msra.mxu0 0.0
    %138 = vmatprep.subr.mxu0 0.0
    %139 = vmatpush1.msra.mxu0 0.0
    %140 = vmatprep.subr.mxu0 0.0
    %141 = vmatpush1.msra.mxu0 0.0
    %142 = vmatprep.subr.mxu0 0.0
    %143 = vmatpush1.msra.mxu0 0.0
    %144 = vmatprep.subr.mxu0 0.0
    %145 = vmatpush1.msra.mxu0 0.0
    %146 = vmatprep.subr.mxu0 0.0
    %147 = vmatpush1.msra.mxu0 0.0
    %148 = vmatprep.mubr.f32.mxu0 0.0
    %149 = vmatmul.mubr.f32.gmra.mrb[0].mxu0 %v60
    %v150 = vpop.f32.mrb[0].mxu0
    %v151 = vadd.f32 %v82, %v150
    %v152 = vpop.f32.mrb[0].mxu0
    %153 = vdwg.mxu0
    %154 = vst [vmem:[#allocation2] sm:$0xff] %v151
    %v155 = vld [vmem:[#allocation2] sm:$0xff]
    %v156 = vld [vmem:[#allocation8] sm:$0xff]
    %v157 = vld [vmem:[#allocation8 + $0x8] sm:$0xff]
    %v158 = vld [vmem:[#allocation8 + $0x10] sm:$0xff]
    %v159 = vld [vmem:[#allocation8 + $0x18] sm:$0xff]
    %v160 = vld [vmem:[#allocation8 + $0x20] sm:$0xff]
    %v161 = vld [vmem:[#allocation8 + $0x28] sm:$0xff]
    %v162 = vld [vmem:[#allocation8 + $0x30] sm:$0xff]
    %v163 = vld [vmem:[#allocation8 + $0x38] sm:$0xff]
    %v164 = vld [vmem:[#allocation8 + $0x40] sm:$0xff]
    %v165 = vld [vmem:[#allocation8 + $0x48] sm:$0xff]
    %v166 = vld [vmem:[#allocation8 + $0x50] sm:$0xff]
    %v167 = vld [vmem:[#allocation8 + $0x58] sm:$0xff]
    %v168 = vld [vmem:[#allocation8 + $0x60] sm:$0xff]
    %v169 = vld [vmem:[#allocation8 + $0x68] sm:$0xff]
    %v170 = vld [vmem:[#allocation8 + $0x70] sm:$0xff]
    %v171 = vld [vmem:[#allocation8 + $0x78] sm:$0xff]
    %v172 = vld [vmem:[%s4] sm:$0x1]
    %v174 = vlaneseq
    %v175 = vshrl.u32 %v174, 7
    %v176 = vsub.s32 0, %v175
    %v177 = vrot.slane %v172, %v176
    %179 = vmatprep.subr.mxu0 0.0
    %180 = vmatpush1.msra.mxu0 %v156
    %181 = vmatprep.subr.mxu0 0.0
    %182 = vmatpush1.msra.mxu0 %v157
    %183 = vmatprep.subr.mxu0 0.0
    %184 = vmatpush1.msra.mxu0 %v158
    %185 = vmatprep.subr.mxu0 0.0
    %186 = vmatpush1.msra.mxu0 %v159
    %187 = vmatprep.subr.mxu0 0.0
    %188 = vmatpush1.msra.mxu0 %v160
    %189 = vmatprep.subr.mxu0 0.0
    %190 = vmatpush1.msra.mxu0 %v161
    %191 = vmatprep.subr.mxu0 0.0
    %192 = vmatpush1.msra.mxu0 %v162
    %193 = vmatprep.subr.mxu0 0.0
    %194 = vmatpush1.msra.mxu0 %v163
    %195 = vmatprep.subr.mxu0 0.0
    %196 = vmatpush1.msra.mxu0 %v164
    %197 = vmatprep.subr.mxu0 0.0
    %198 = vmatpush1.msra.mxu0 %v165
    %199 = vmatprep.subr.mxu0 0.0
    %200 = vmatpush1.msra.mxu0 %v166
    %201 = vmatprep.subr.mxu0 0.0
    %202 = vmatpush1.msra.mxu0 %v167
    %203 = vmatprep.subr.mxu0 0.0
    %204 = vmatpush1.msra.mxu0 %v168
    %205 = vmatprep.subr.mxu0 0.0
    %206 = vmatpush1.msra.mxu0 %v169
    %207 = vmatprep.subr.mxu0 0.0
    %208 = vmatpush1.msra.mxu0 %v170
    %209 = vmatprep.subr.mxu0 0.0
    %210 = vmatpush1.msra.mxu0 %v171
    %211 = vmatprep.subr.mxu0 0.0
    %212 = vmatpush1.msra.mxu0 0.0
    %213 = vmatprep.subr.mxu0 0.0
    %214 = vmatpush1.msra.mxu0 0.0
    %215 = vmatprep.subr.mxu0 0.0
    %216 = vmatpush1.msra.mxu0 0.0
    %217 = vmatprep.subr.mxu0 0.0
    %218 = vmatpush1.msra.mxu0 0.0
    %219 = vmatprep.subr.mxu0 0.0
    %220 = vmatpush1.msra.mxu0 0.0
    %221 = vmatprep.subr.mxu0 0.0
    %222 = vmatpush1.msra.mxu0 0.0
    %223 = vmatprep.subr.mxu0 0.0
    %224 = vmatpush1.msra.mxu0 0.0
    %225 = vmatprep.subr.mxu0 0.0
    %226 = vmatpush1.msra.mxu0 0.0
    %227 = vmatprep.subr.mxu0 0.0
    %228 = vmatpush1.msra.mxu0 0.0
    %229 = vmatprep.subr.mxu0 0.0
    %230 = vmatpush1.msra.mxu0 0.0
    %231 = vmatprep.subr.mxu0 0.0
    %232 = vmatpush1.msra.mxu0 0.0
    %233 = vmatprep.subr.mxu0 0.0
    %234 = vmatpush1.msra.mxu0 0.0
    %235 = vmatprep.subr.mxu0 0.0
    %236 = vmatpush1.msra.mxu0 0.0
    %237 = vmatprep.subr.mxu0 0.0
    %238 = vmatpush1.msra.mxu0 0.0
    %239 = vmatprep.subr.mxu0 0.0
    %240 = vmatpush1.msra.mxu0 0.0
    %241 = vmatprep.subr.mxu0 0.0
    %242 = vmatpush1.msra.mxu0 0.0
    %243 = vmatprep.mubr.f32.mxu0 0.0
    %244 = vmatmul.mubr.f32.gmra.mrb[0].mxu0 %v155
    %v245 = vpop.f32.mrb[0].mxu0
    %v246 = vadd.f32 %v177, %v245
    %v247 = vpop.f32.mrb[0].mxu0
    %248 = vdwg.mxu0
    %v249 = vtanh.pop %v246
    %250 = vst [vmem:[#allocation9] sm:$0xff] %v249
    // Predicated region
    $region34: #{tpu_custom_call.1} parent=1 // pred_check
      _
    $region35: #{tpu_custom_call.1} parent=1 // pred_check_branch
      %252 = sbr.rel (0) target = $region37
    $region36: #{tpu_custom_call.1} parent=1 // pred_region
      %s254 = ssub.s32 128, 128
      %255 = vsyncadd [#allocation5], %s254
      %s257 = sshll.u32 [#allocation9], 4
      %s258 = int_to_ptr.vmem [resolvable:$true] %s257
      %260 = dma.vmem_to_hbm [thread:$0]  %s258, 128, %s5, [#allocation5]
    $region37: #{tpu_custom_call.1} parent=1 // pred_fallthru
      _
    // Predicated region
    $region38: #{tpu_custom_call.1} parent=1 // pred_check
      _
    $region39: #{tpu_custom_call.1} parent=1 // pred_check_branch
      %262 = sbr.rel (0) target = $region41
    $region40: #{tpu_custom_call.1} parent=1 // pred_region
      %263 = dma.done [#allocation5], 128
    $region41: #{tpu_custom_call.1} parent=1 // pred_fallthru
      _
    %264 = vsyncpa [#allocation4], 1
    %265 = vsyncpa [#allocation7], 1
    %266 = vsyncpa [#allocation5], 1

</llo_original>
